<compile_context>
chip_gen: v5e
topology: v5e:2x2
jax: 0.10.0
libtpu: 0.0.40
codegen_flags: <defaults>
</compile_context>

<pallas_src>
import jax
import jax.numpy as jnp
from jax.experimental import pallas as pl
from jax.experimental.pallas import tpu as pltpu

_LANE = 128
_TARGET_BLOCK_BYTES = 4 << 20   # ~4 MiB per block
_VMEM_LIMIT_BYTES = 48 << 20    # explicit; > v5e 16 MiB scoped default, < v7x 64 MiB physical


def _normalize_kernel(scale_ref, bias_ref, img_ref, out_ref):
    # scale/bias live in SMEM; one scalar load per (batch, channel) block.
    c = pl.program_id(0)
    s = scale_ref[c]
    b = bias_ref[c]
    x = img_ref[...].astype(jnp.float32)          # FMA in f32, cast only on store
    out_ref[...] = (x * s + b).astype(out_ref.dtype)


def _min_sublane(dtype):
    # Sub-32-bit dtypes pack along sublanes: f32 -> 8, bf16/f16 -> 16, (u)int8 -> 32.
    return max(8, 32 // jnp.dtype(dtype).itemsize)


def _pick_tiles(h, w, elem_bytes, sublane):
    """Choose (th, tw) for a (1, th, tw) block obeying the (sublane, 128) rules."""
    # Lane (last) dim: cut on 128-lane boundaries only when legal; otherwise keep
    # the full width (rows then carry the tiling, so non-128-divisible widths
    # such as 1000 stay cheap instead of blowing VMEM).
    if w > _LANE and w % _LANE == 0:
        max_cols = max(
            _LANE, (_TARGET_BLOCK_BYTES // (sublane * elem_bytes)) // _LANE * _LANE
        )
        tw = min(w, max_cols)
    else:
        tw = w
    # Sublane (second-to-last) dim: full dim if it fits the budget, else a
    # sublane multiple sized to the budget.
    if h <= sublane:
        th = h
    else:
        row_budget = _TARGET_BLOCK_BYTES // (tw * elem_bytes)
        if h <= row_budget:
            th = h
        else:
            th = max(sublane, (row_budget // sublane) * sublane)
    return th, tw


def normalize_image(img, mean, std, out_dtype=None):
    """Per-channel normalize of an NCHW image: (img - mean[c]) / std[c].

    Integer (uint8) inputs are accepted and the implicit ToTensor /255 is folded
    into the scale; in that case the output defaults to float32.
    """
    n, c, h, w = img.shape
    mean = jnp.asarray(mean, dtype=jnp.float32).reshape(-1)
    std = jnp.asarray(std, dtype=jnp.float32).reshape(-1)
    if mean.size == 1:
        mean = jnp.full((c,), mean[0], dtype=jnp.float32)
    if std.size == 1:
        std = jnp.full((c,), std[0], dtype=jnp.float32)

    is_int_input = jnp.issubdtype(img.dtype, jnp.integer)
    if out_dtype is None:
        out_dtype = jnp.float32 if is_int_input else img.dtype

    # Fold the divide (and the uint8 /255, if applicable) into one FMA:
    #   out = img * scale[c] + bias[c]
    denom = std * 255.0 if is_int_input else std
    scale = (1.0 / denom).astype(jnp.float32)     # (C,)
    bias = (-mean / std).astype(jnp.float32)      # (C,)

    # One parallel grid row per (batch, channel) pair.
    x3d = img.reshape(n * c, h, w)
    scale_rows = jnp.tile(scale, n)               # (N*C,)
    bias_rows = jnp.tile(bias, n)                 # (N*C,)

    in_bytes = jnp.dtype(img.dtype).itemsize
    out_bytes = jnp.dtype(out_dtype).itemsize
    sublane = max(_min_sublane(img.dtype), _min_sublane(out_dtype))
    th, tw = _pick_tiles(h, w, max(in_bytes, out_bytes), sublane)

    # v7x megacore: guarantee >= 2 parallel grid steps so both TensorCores work.
    if n * c == 1 and pl.cdiv(h, th) * pl.cdiv(w, tw) == 1 and h > sublane:
        th = min(h, max(sublane, (pl.cdiv(h, 2) + sublane - 1) // sublane * sublane))

    grid = (n * c, pl.cdiv(h, th), pl.cdiv(w, tw))

    out3d = pl.pallas_call(
        _normalize_kernel,
        out_shape=jax.ShapeDtypeStruct((n * c, h, w), out_dtype),
        grid_spec=pltpu.PrefetchScalarGridSpec(
            num_scalar_prefetch=2,               # scale / bias -> SMEM, no DMA streams
            grid=grid,
            in_specs=[
                pl.BlockSpec((1, th, tw), lambda ci, i, j, s, b: (ci, i, j)),
            ],
            out_specs=pl.BlockSpec((1, th, tw), lambda ci, i, j, s, b: (ci, i, j)),
        ),
        compiler_params=pltpu.CompilerParams(
            dimension_semantics=("parallel", "parallel", "parallel"),
            vmem_limit_bytes=_VMEM_LIMIT_BYTES,
        ),
    )(scale_rows, bias_rows, x3d)

    return out3d.reshape(n, c, h, w)


def normalize_sample(sample, mean, std, out_dtype=None):
    """Mirrors Normalize.forward: normalizes 'image', passes 'semantic_mask' through."""
    # TODO(synk): PyTorch's inplace=True has no meaning under JAX's functional
    # semantics; the result is returned as a fresh array.
    output = {"image": normalize_image(sample["image"], mean, std, out_dtype)}
    if "semantic_mask" in sample:
        output["semantic_mask"] = sample["semantic_mask"]
    return output


if __name__ == "__main__":
    key = jax.random.PRNGKey(0)
    k_img, k_mask, k_img2 = jax.random.split(key, 3)

    # Primary test: small NCHW float image + pass-through mask.
    N, C, H, W = 2, 4, 16, 16
    img = jax.random.uniform(k_img, (N, C, H, W), dtype=jnp.float32)
    mask = (jax.random.uniform(k_mask, (N, 1, H, W)) > 0.5).astype(jnp.int32)

    mean = jnp.array([0.485, 0.456, 0.406, 0.5], dtype=jnp.float32)
    std = jnp.array([0.229, 0.224, 0.225, 0.25], dtype=jnp.float32)

    sample = {"image": img, "semantic_mask": mask}
    out = normalize_sample(sample, mean, std)
    out_img = jax.block_until_ready(out["image"])

    # Reference (plain JAX). FMA rewrite changes rounding slightly -> 1e-5 tol.
    ref = (img - mean[None, :, None, None]) / std[None, :, None, None]
    assert jnp.allclose(out_img, ref, atol=1e-5), "mismatch vs reference"
    assert "semantic_mask" in out and out["semantic_mask"].shape == mask.shape

    # Secondary test: spatial size NOT a multiple of 128 (scaled-down MoNuSeg 1000x1000 case).
    img2 = jax.random.uniform(k_img2, (1, 3, 20, 20), dtype=jnp.float32)
    out2 = jax.block_until_ready(normalize_image(img2, mean[:3], std[:3]))
    ref2 = (img2 - mean[:3][None, :, None, None]) / std[:3][None, :, None, None]
    assert jnp.allclose(out2, ref2, atol=1e-5), "mismatch vs reference (non-128 width)"

    print("KERNEL_OK")
</pallas_src>

<mosaic_0001>
module attributes {stable_mosaic.version = 11 : i64} {
  func.func @_normalize_kernel(%arg0: i32, %arg1: i32, %arg2: i32, %arg3: memref<8xf32, #tpu.memory_space<smem>>, %arg4: memref<8xf32, #tpu.memory_space<smem>>, %arg5: memref<1x16x16xf32, #tpu.memory_space<vmem>>, %arg6: memref<1x16x16xf32, #tpu.memory_space<vmem>>) attributes {dimension_semantics = [#tpu.dimension_semantics<parallel>, #tpu.dimension_semantics<parallel>, #tpu.dimension_semantics<parallel>], iteration_bounds = array<i64: 8, 1, 1>, scalar_prefetch = 2 : i64, scratch_operands = 0 : i64, tpu.core_type = #tpu.core_type<tc>, window_params = [{transform_indices = @transform_0, window_bounds = array<i64: 1, 16, 16>}, {transform_indices = @transform_1, window_bounds = array<i64: 1, 16, 16>}]} {
    %0 = arith.index_cast %arg0 : i32 to index
    %1 = memref.load %arg3[%0] : memref<8xf32, #tpu.memory_space<smem>>
    %2 = arith.index_cast %arg0 : i32 to index
    %3 = memref.load %arg4[%2] : memref<8xf32, #tpu.memory_space<smem>>
    %c0 = arith.constant 0 : index
    %c0_0 = arith.constant 0 : index
    %c0_1 = arith.constant 0 : index
    %4 = vector.load %arg5[%c0, %c0_0, %c0_1] : memref<1x16x16xf32, #tpu.memory_space<vmem>>, vector<1x16x16xf32>
    %5 = vector.broadcast %1 : f32 to vector<1x16x16xf32>
    %6 = arith.mulf %4, %5 : vector<1x16x16xf32>
    %7 = vector.broadcast %3 : f32 to vector<1x16x16xf32>
    %8 = arith.addf %6, %7 : vector<1x16x16xf32>
    %c0_2 = arith.constant 0 : index
    %c0_3 = arith.constant 0 : index
    %c0_4 = arith.constant 0 : index
    %9 = vector.load %arg6[%c0_2, %c0_3, %c0_4] : memref<1x16x16xf32, #tpu.memory_space<vmem>>, vector<1x16x16xf32>
    tpu.vector_store %arg6[%c0_2, %c0_3, %c0_4], %8 {strides = array<i32>} : memref<1x16x16xf32, #tpu.memory_space<vmem>>, vector<1x16x16xf32>,
    return
  }
  func.func @transform_0(%arg0: i32, %arg1: i32, %arg2: i32, %arg3: memref<8xf32, #tpu.memory_space<smem>>, %arg4: memref<8xf32, #tpu.memory_space<smem>>) -> (i32, i32, i32) {
    %c0_i32 = arith.constant 0 : i32
    return %arg0, %arg1, %arg2 : i32, i32, i32
  }
  func.func @transform_1(%arg0: i32, %arg1: i32, %arg2: i32, %arg3: memref<8xf32, #tpu.memory_space<smem>>, %arg4: memref<8xf32, #tpu.memory_space<smem>>) -> (i32, i32, i32) {
    %c0_i32 = arith.constant 0 : i32
    return %arg0, %arg1, %arg2 : i32, i32, i32
  }
}

</mosaic_0001>

<llo_original>
// kernel: tpu_custom_call.1
$region0: #{tpu_custom_call.1}
  #allocation0 [shape = 'u32[]', space=smem, size = 0x4, offset = 0x4, fixed_abs, tag = 'smem constant byte address 0x4 - core index']
  #allocation1 [shape = 'u32[72,128]{1,0:T(1,128)}', space=vmem, size = 0x9000, scoped, tag = 'internal scratch']
  #allocation2 [shape = 's32[1]{0}', space=sflag, size = 0x4, scoped, tag = 'scoped memory for tpu_custom_call.1']
  #allocation3 [shape = 'u8[512]{0}', space=smem, size = 0x200, scoped, tag = 'prefetched SMEM operand 0']
  #allocation4 [shape = 'u8[512]{0}', space=smem, size = 0x200, scoped, tag = 'prefetched SMEM operand 1']
  %s0 = inlined_call_operand.hbm [shape: f32[8], index: 0, kind: input, shape index: {}]
  %s1 = inlined_call_operand.hbm [shape: f32[8], index: 1, kind: input, shape index: {}]
  %s2 = inlined_call_operand.hbm [shape: f32[8,16,16], index: 2, kind: input, shape index: {}]
  %s3 = inlined_call_operand.hbm [shape: f32[8,16,16], index: 3, kind: output, shape index: {}]
  %s4 = sld [smem:[#allocation0]]
  $region41: #{tpu_custom_call.1} parent=0
    _
  %s6 = ssub.s32 1, %s4
  %s7 = scalar_select 0, %s6, %s4
  %s9 = sshll.u32 %s0, 4
  %s10 = int_to_ptr.hbm [resolvable:$true] %s9
  %12 = dma.hbm_to_smem %s10, 16, [#allocation3], [#allocation2]
  %s14 = sshll.u32 %s1, 4
  %s15 = int_to_ptr.hbm [resolvable:$true] %s14
  %17 = dma.hbm_to_smem %s15, 16, [#allocation4], [#allocation2]
  %19 = dma.done [#allocation2], 32
  %20 = sfence
  $region1: #{tpu_custom_call.1} parent=0
    #allocation5 [shape = 'u8[16384]{0}', space=vmem, size = 0x4000, scoped, tag = 'input window, operand 2']
    #allocation6 [shape = 's32[2]{0}', space=sflag, size = 0x8, scoped, tag = 'scoped memory for tpu_custom_call.1']
    #allocation7 [shape = 's32[2]{0}', space=sflag, size = 0x8, scoped, tag = 'scoped memory for tpu_custom_call.1']
    #allocation8 [shape = 'u8[16384]{0}', space=vmem, size = 0x4000, scoped, tag = 'output window, operand 0']
    %21 = vsyncpa [#allocation6], 0
    %s22 = scalar_lea.sflag [#allocation6], 1
    %23 = vsyncpa %s22, 0
    %24 = vsyncpa [#allocation7], 0
    %s25 = scalar_lea.sflag [#allocation7], 1
    %26 = vsyncpa %s25, 0
    loop: start=0, step=1, limit=10
    $region2: #{tpu_custom_call.1} parent=1 // loop_pre_header
      _
    $region3: #{tpu_custom_call.1} parent=1 // loop_header
      %s28 = sphi 0, %s32
      %p29 = scmp.ge.s32.totalorder %s28, 10
      %s35 = sphi 0, %s54
      %s36 = sphi 0, %s50
      %s37 = sphi 0, %s46
      %s38 = sphi 0, %s35
      %s39 = sphi 0, %s36
      %s40 = sphi 0, %s37
      %s41 = sphi 0, %s38
      %s42 = sphi 0, %s39
      %s43 = sphi 0, %s40
      %s61 = sphi 0, %s63
      %s64 = sphi 0, %s61
      %s65 = sphi 0, %s64
      %s81 = sphi 0, %s65
      %s91 = sphi 0, %s93
      %s94 = sphi 0, %s91
      %s95 = sphi 0, %s94
      %s111 = sphi 0, %s95
    $region4: #{tpu_custom_call.1} parent=1 // loop_header_branch
      %31 = sbr.rel (%p29) target = $region8
    $region5: #{tpu_custom_call.1} parent=1 // loop_body
      %s33 = ssub.s32 %s28, 1
      %s34 = ssub.s32 %s28, 2
      %s44 = sadd.s32 1, %s37
      %p45 = scmp.ge.s32.totalorder %s44, 1
      %s46 = scalar_select %p45, 0, %s44
      %s47 = sadd.s32 1, %s36
      %s48 = scalar_select %p45, %s47, %s36
      %p49 = scmp.ge.s32.totalorder %s48, 1
      %s50 = scalar_select %p49, 0, %s48
      %s51 = sadd.s32 1, %s35
      %s52 = scalar_select %p49, %s51, %s35
      %p53 = scmp.ge.s32.totalorder %s52, 8
      %s54 = scalar_select %p53, 0, %s52
      %s55 = ssub.s32 %s35, %s54
      %s56 = ssub.s32 %s36, %s50
      %s57 = sor.u32 %s55, %s56
      %s58 = ssub.s32 %s37, %s46
      %s59 = sor.u32 %s57, %s58
      %p60 = scmp.eq.s32.totalorder %s59, 0
      %s62 = sadd.s32 %s61, 1
      %s63 = scalar_select %p60, %s61, %s62
      %p66 = pneg %p60
      %p67 = scmp.eq.s32.totalorder %s28, 7
      %p68 = por %p66, %p67
      %p69 = scmp.ne.s32.totalorder %s61, %s64
      %p70 = scmp.eq.s32.totalorder %s28, 0
      %p71 = por %p69, %p70
      %p72 = scmp.ne.s32.totalorder %s61, %s64
      %p73 = scmp.eq.s32.totalorder %s33, 7
      %p74 = por %p72, %p73
      %p75 = scmp.ne.s32.totalorder %s64, %s65
      %p76 = scmp.eq.s32.totalorder %s33, 0
      %p77 = por %p75, %p76
      %p78 = scmp.ne.s32.totalorder %s64, %s65
      %p79 = scmp.eq.s32.totalorder %s34, 7
      %p80 = por %p78, %p79
      %p82 = scmp.ne.s32.totalorder %s65, %s81
      %p83 = scmp.eq.s32.totalorder %s34, 0
      %p84 = por %p82, %p83
      %s85 = ssub.s32 %s35, %s54
      %s86 = ssub.s32 %s36, %s50
      %s87 = sor.u32 %s85, %s86
      %s88 = ssub.s32 %s37, %s46
      %s89 = sor.u32 %s87, %s88
      %p90 = scmp.eq.s32.totalorder %s89, 0
      %s92 = sadd.s32 %s91, 1
      %s93 = scalar_select %p90, %s91, %s92
      %p96 = pneg %p90
      %p97 = scmp.eq.s32.totalorder %s28, 7
      %p98 = por %p96, %p97
      %p99 = scmp.ne.s32.totalorder %s91, %s94
      %p100 = scmp.eq.s32.totalorder %s28, 0
      %p101 = por %p99, %p100
      %p102 = scmp.ne.s32.totalorder %s91, %s94
      %p103 = scmp.eq.s32.totalorder %s33, 7
      %p104 = por %p102, %p103
      %p105 = scmp.ne.s32.totalorder %s94, %s95
      %p106 = scmp.eq.s32.totalorder %s33, 0
      %p107 = por %p105, %p106
      %p108 = scmp.ne.s32.totalorder %s94, %s95
      %p109 = scmp.eq.s32.totalorder %s34, 7
      %p110 = por %p108, %p109
      %p112 = scmp.ne.s32.totalorder %s95, %s111
      %p113 = scmp.eq.s32.totalorder %s34, 0
      %p114 = por %p112, %p113
      %p115 = scmp.le.s32.totalorder 1, %s28
      %p116 = scmp.lt.s32.totalorder %s28, 9
      %p117 = pnand %p115, %p116
      %p118 = pneg %p117
      // Predicated region
      $region9: #{tpu_custom_call.1} parent=5 // pred_check
        _
      $region10: #{tpu_custom_call.1} parent=5 // pred_check_branch
        %120 = sbr.rel (%p117) target = $region12
      $region11: #{tpu_custom_call.1} parent=5 // pred_region
        %s121 = ssub.s32 %s28, 1
      $region12: #{tpu_custom_call.1} parent=5 // pred_fallthru
        _
      %p122 = scmp.lt.s32.totalorder %s28, 8
      // Predicated region
      $region13: #{tpu_custom_call.1} parent=5 // pred_check
        %p123 = pneg %p122
      $region14: #{tpu_custom_call.1} parent=5 // pred_check_branch
        %125 = sbr.rel (%p123) target = $region16
      $region15: #{tpu_custom_call.1} parent=5 // pred_region
        // Predicated region
        $region17: #{tpu_custom_call.1} parent=15 // pred_check
          %p126 = pneg %p71
        $region18: #{tpu_custom_call.1} parent=15 // pred_check_branch
          %128 = sbr.rel (%p126) target = $region20
        $region19: #{tpu_custom_call.1} parent=15 // pred_region
          %s129 = sand.u32 %s61, 1
          %s130 = scalar_lea.sflag [#allocation6], %s129
          %s131 = sand.u32 %s61, 1
          %s132 = smul.addr %s131, 16
          %s133 = scalar_lea.vmem [#allocation5], %s132
          %s134 = smul.u32 2, %s36
          %136 = vsyncadd %s130, 0
          %s137 = sadd.s32 %s37, %s134
          %s138 = smul.addr %s35, 2
          %s139 = sadd.s32 %s137, %s138
          %s140 = smul.addr %s139, 8
          %s141 = scalar_lea.hbm %s2, %s140
          %s142 = sshll.u32 %s141, 4
          %s143 = int_to_ptr.hbm [resolvable:$true] %s142
          %s144 = sshll.u32 %s133, 4
          %s145 = int_to_ptr.vmem [resolvable:$true] %s144
          %150 = dma.hbm_to_vmem [thread:$0]  %s143, 256, %s145, %s130, 128, 128, 8
        $region20: #{tpu_custom_call.1} parent=15 // pred_fallthru
          _
      $region16: #{tpu_custom_call.1} parent=5 // pred_fallthru
        _
      %p151 = scmp.le.s32.totalorder 1, %s28
      %p152 = scmp.lt.s32.totalorder %s28, 9
      %p153 = pnand %p151, %p152
      %p154 = pneg %p153
      // Predicated region
      $region21: #{tpu_custom_call.1} parent=5 // pred_check
        _
      $region22: #{tpu_custom_call.1} parent=5 // pred_check_branch
        %156 = sbr.rel (%p153) target = $region24
      $region23: #{tpu_custom_call.1} parent=5 // pred_region
        %s157 = ssub.s32 %s28, 1
        %s158 = sand.u32 %s64, 1
        %s159 = scalar_lea.sflag [#allocation6], %s158
        %s160 = sand.u32 %s64, 1
        %s161 = smul.addr %s160, 16
        %s162 = scalar_lea.vmem [#allocation5], %s161
        // Predicated region
        $region25: #{tpu_custom_call.1} parent=23 // pred_check
          %p163 = pneg %p77
        $region26: #{tpu_custom_call.1} parent=23 // pred_check_branch
          %165 = sbr.rel (%p163) target = $region28
        $region27: #{tpu_custom_call.1} parent=23 // pred_region
          %167 = dma.done %s159, 256
        $region28: #{tpu_custom_call.1} parent=23 // pred_fallthru
          _
        %s168 = sand.u32 %s64, 1
        %s169 = scalar_lea.sflag [#allocation6], %s168
        %s170 = sand.u32 %s64, 1
        %s171 = smul.addr %s170, 16
        %s172 = scalar_lea.vmem [#allocation5], %s171
        %p173 = pneg %p77
        %p174 = pneg %p74
        %p175 = pneg %p107
        %p176 = pneg %p104
        %s177 = sand.u32 %s94, 1
        %s178 = scalar_lea.sflag [#allocation7], %s177
        %s179 = sand.u32 %s94, 1
        %s180 = smul.addr %s179, 16
        %s181 = scalar_lea.vmem [#allocation8], %s180
        %s182 = smul.u32 2, %s39
        %s183 = smul.u32 2, %s39
        %s184 = sld [smem:[#allocation3 + %s38]]
        %s185 = sld [smem:[#allocation4 + %s38]]
        %v186 = vld [vmem:[%s162] sm:$0xff]
        %v187 = vld [vmem:[%s162 + $0x8] sm:$0xff]
        %v188 = vstv %s184
        %v189 = vmul.f32 %v186, %v188
        %v190 = vmul.f32 %v187, %v188
        %v191 = vstv %s185
        %v192 = vadd.f32 %v189, %v191
        %v193 = vadd.f32 %v190, %v191
        %vm194 = vcmask 130048
        %195 = vst.msk [vmem:[%s181] sm:$0xff] %vm194, %v192
        %196 = vst.msk [vmem:[%s181 + $0x8] sm:$0xff] %vm194, %v193
        %s197 = sand.u32 %s94, 1
        %s198 = scalar_lea.sflag [#allocation7], %s197
        %s199 = sand.u32 %s94, 1
        %s200 = smul.addr %s199, 16
        %s201 = scalar_lea.vmem [#allocation8], %s200
        // Predicated region
        $region29: #{tpu_custom_call.1} parent=23 // pred_check
          %p202 = pneg %p104
        $region30: #{tpu_custom_call.1} parent=23 // pred_check_branch
          %204 = sbr.rel (%p202) target = $region32
        $region31: #{tpu_custom_call.1} parent=23 // pred_region
          %s205 = smul.u32 2, %s39
          %207 = vsyncadd %s198, 0
          %s208 = sadd.s32 %s40, %s205
          %s209 = smul.addr %s38, 2
          %s210 = sadd.s32 %s208, %s209
          %s211 = smul.addr %s210, 8
          %s212 = scalar_lea.hbm %s3, %s211
          %s213 = sshll.u32 %s201, 4
          %s214 = int_to_ptr.vmem [resolvable:$true] %s213
          %s215 = sshll.u32 %s212, 4
          %s216 = int_to_ptr.hbm [resolvable:$true] %s215
          %221 = dma.vmem_to_hbm [thread:$0]  %s214, 256, %s216, %s198, 128, 128, 8
        $region32: #{tpu_custom_call.1} parent=23 // pred_fallthru
          _
      $region24: #{tpu_custom_call.1} parent=5 // pred_fallthru
        _
      %p222 = scmp.le.s32.totalorder 2, %s28
      // Predicated region
      $region33: #{tpu_custom_call.1} parent=5 // pred_check
        %p223 = pneg %p222
      $region34: #{tpu_custom_call.1} parent=5 // pred_check_branch
        %225 = sbr.rel (%p223) target = $region36
      $region35: #{tpu_custom_call.1} parent=5 // pred_region
        %s226 = ssub.s32 %s28, 2
        // Predicated region
        $region37: #{tpu_custom_call.1} parent=35 // pred_check
          %p227 = pneg %p110
        $region38: #{tpu_custom_call.1} parent=35 // pred_check_branch
          %229 = sbr.rel (%p227) target = $region40
        $region39: #{tpu_custom_call.1} parent=35 // pred_region
          %s230 = sand.u32 %s95, 1
          %s231 = scalar_lea.sflag [#allocation7], %s230
          %s232 = sand.u32 %s95, 1
          %s233 = smul.addr %s232, 16
          %s234 = scalar_lea.vmem [#allocation8], %s233
          %236 = dma.done %s231, 256
        $region40: #{tpu_custom_call.1} parent=35 // pred_fallthru
          _
      $region36: #{tpu_custom_call.1} parent=5 // pred_fallthru
        _
    $region6: #{tpu_custom_call.1} parent=1 // loop_footer
      %s32 = sadd.s32 1, %s28
    $region7: #{tpu_custom_call.1} parent=1 // loop_footer_branch
      %27 = sbr.rel target = $region3
    $region8: #{tpu_custom_call.1} parent=1 // loop_exit
      _
    %237 = vsyncpa [#allocation6], 1
    %s238 = scalar_lea.sflag [#allocation6], 1
    %239 = vsyncpa %s238, 1
    %240 = vsyncpa [#allocation7], 1
    %s241 = scalar_lea.sflag [#allocation7], 1
    %242 = vsyncpa %s241, 1

</llo_original>
